<compile_context>
chip_gen: v7x
topology: tpu7x:2x2x1
jax: 0.10.0
libtpu: 0.0.40
codegen_flags: <defaults>
</compile_context>

<pallas_src>
import jax
import jax.numpy as jnp
from jax.experimental import pallas as pl
from jax.experimental.pallas import tpu as pltpu


def _make_vdn_kernel(num_agents):
    """Kernel summing `num_agents` (k_i, TB) tiles into one (1, TB) tile."""

    def kernel(*refs):
        out_ref = refs[num_agents]
        # Each input block is (k_i, TB): sum the (few) sublane rows, then add
        # across agents.  For the common k_i == 1 case this is N-1 VPU adds.
        acc = jnp.sum(refs[0][...], axis=0, keepdims=True)
        for i in range(1, num_agents):
            acc = acc + jnp.sum(refs[i][...], axis=0, keepdims=True)
        out_ref[...] = acc

    return kernel


def _pick_batch_tile(batch):
    # Largest lane tile (multiple of 128) that divides the batch; prefer big
    # tiles to amortize the ~0.35us per-grid-step overhead.
    for tb in (32768, 16384, 8192, 4096, 2048, 1024, 512, 256, 128):
        if batch % tb == 0:
            return tb
    # Small / irregular batch: single full-extent block (allowed even when the
    # lane dim is not a multiple of 128).
    return batch


def mixq_vdn(q_list):
    """VDN mixing: q_total[b] = sum over agents (and their columns) of Q values.

    q_list: list of arrays, each [B, k_i] (typically k_i == 1), or [B].
    Returns: [B, 1] float32 array, matching
             torch.sum(torch.cat(q_list, dim=1), dim=1, keepdim=True).
    """
    # NOTE: for tiny shapes (e.g. B=2, N=4) a plain fused
    # jnp.sum(jnp.concatenate(...)) would beat any custom kernel; the Pallas
    # path is kept unconditional here so the kernel itself is exercised.
    qs = []
    for q in q_list:
        q = jnp.asarray(q, jnp.float32)
        if q.ndim == 1:
            q = q[None, :]                  # (1, B)
        elif q.shape[1] == 1:
            q = q.reshape(1, q.shape[0])    # free (B, 1) -> (1, B) reshape
        else:
            q = q.T                         # rare general k_i > 1 case
        qs.append(q)

    batch = qs[0].shape[1]
    num_agents = len(qs)
    tb = _pick_batch_tile(batch)
    grid = (batch // tb,)

    in_specs = [pl.BlockSpec((q.shape[0], tb), lambda j: (0, j)) for q in qs]
    out_specs = pl.BlockSpec((1, tb), lambda j: (0, j))

    out = pl.pallas_call(
        _make_vdn_kernel(num_agents),
        out_shape=jax.ShapeDtypeStruct((1, batch), jnp.float32),
        grid_spec=pltpu.PrefetchScalarGridSpec(
            num_scalar_prefetch=0,
            grid=grid,
            in_specs=in_specs,
            out_specs=out_specs,
        ),
        compiler_params=pltpu.CompilerParams(
            # Batch tiles are independent -> shard across TensorCores on v7x;
            # no-op on single-TC v5e/v6e.
            dimension_semantics=("parallel",),
        ),
    )(*qs)

    return out.reshape(batch, 1)            # free reshape back to keepdim layout


def _reference(q_list):
    q_cat = jnp.concatenate(
        [jnp.asarray(q, jnp.float32).reshape(jnp.asarray(q).shape[0], -1)
         for q in q_list],
        axis=1,
    )
    return jnp.sum(q_cat, axis=1, keepdims=True)


if __name__ == "__main__":
    root = jax.random.PRNGKey(0)
    key_a, key_b = jax.random.split(root)

    # --- Small case matching the PyTorch usage: 4 agents, each Q of shape [2, 1].
    batch, n_agents = 2, 4
    keys = jax.random.split(key_a, n_agents)
    q_list = [jax.random.normal(k, (batch, 1), dtype=jnp.float32) for k in keys]

    q_total = mixq_vdn(q_list)
    jax.block_until_ready(q_total)
    ref = _reference(q_list)
    assert q_total.shape == (batch, 1), q_total.shape
    assert jnp.allclose(q_total, ref, atol=1e-5), (q_total, ref)

    # --- Slightly larger case that exercises the tiled (multi-block) grid path.
    batch2, n_agents2 = 384, 3
    keys2 = jax.random.split(key_b, n_agents2)
    q_list2 = [jax.random.normal(k, (batch2, 1), dtype=jnp.float32) for k in keys2]

    q_total2 = mixq_vdn(q_list2)
    jax.block_until_ready(q_total2)
    ref2 = _reference(q_list2)
    assert q_total2.shape == (batch2, 1), q_total2.shape
    assert jnp.allclose(q_total2, ref2, atol=1e-5), (q_total2, ref2)

    print("KERNEL_OK")
</pallas_src>

<mosaic_0001>
module attributes {stable_mosaic.version = 11 : i64} {
  func.func @kernel(%arg0: i32, %arg1: memref<1x2xf32, #tpu.memory_space<vmem>>, %arg2: memref<1x2xf32, #tpu.memory_space<vmem>>, %arg3: memref<1x2xf32, #tpu.memory_space<vmem>>, %arg4: memref<1x2xf32, #tpu.memory_space<vmem>>, %arg5: memref<1x2xf32, #tpu.memory_space<vmem>>) attributes {dimension_semantics = [#tpu.dimension_semantics<parallel>], iteration_bounds = array<i64: 1>, scalar_prefetch = 0 : i64, scratch_operands = 0 : i64, tpu.core_type = #tpu.core_type<tc>, window_params = [{transform_indices = @transform_0, window_bounds = array<i64: 1, 2>}, {transform_indices = @transform_1, window_bounds = array<i64: 1, 2>}, {transform_indices = @transform_2, window_bounds = array<i64: 1, 2>}, {transform_indices = @transform_3, window_bounds = array<i64: 1, 2>}, {transform_indices = @transform_4, window_bounds = array<i64: 1, 2>}]} {
    %c0 = arith.constant 0 : index
    %c0_0 = arith.constant 0 : index
    %0 = vector.load %arg1[%c0, %c0_0] : memref<1x2xf32, #tpu.memory_space<vmem>>, vector<1x2xf32>
    %cst = arith.constant dense<0.000000e+00> : vector<2xf32>
    %1 = vector.multi_reduction <add>, %0, %cst [0] : vector<1x2xf32> to vector<2xf32>
    %2 = vector.shape_cast %1 : vector<2xf32> to vector<1x2xf32>
    %c0_1 = arith.constant 0 : index
    %c0_2 = arith.constant 0 : index
    %3 = vector.load %arg2[%c0_1, %c0_2] : memref<1x2xf32, #tpu.memory_space<vmem>>, vector<1x2xf32>
    %cst_3 = arith.constant dense<0.000000e+00> : vector<2xf32>
    %4 = vector.multi_reduction <add>, %3, %cst_3 [0] : vector<1x2xf32> to vector<2xf32>
    %5 = vector.shape_cast %4 : vector<2xf32> to vector<1x2xf32>
    %6 = arith.addf %2, %5 : vector<1x2xf32>
    %c0_4 = arith.constant 0 : index
    %c0_5 = arith.constant 0 : index
    %7 = vector.load %arg3[%c0_4, %c0_5] : memref<1x2xf32, #tpu.memory_space<vmem>>, vector<1x2xf32>
    %cst_6 = arith.constant dense<0.000000e+00> : vector<2xf32>
    %8 = vector.multi_reduction <add>, %7, %cst_6 [0] : vector<1x2xf32> to vector<2xf32>
    %9 = vector.shape_cast %8 : vector<2xf32> to vector<1x2xf32>
    %10 = arith.addf %6, %9 : vector<1x2xf32>
    %c0_7 = arith.constant 0 : index
    %c0_8 = arith.constant 0 : index
    %11 = vector.load %arg4[%c0_7, %c0_8] : memref<1x2xf32, #tpu.memory_space<vmem>>, vector<1x2xf32>
    %cst_9 = arith.constant dense<0.000000e+00> : vector<2xf32>
    %12 = vector.multi_reduction <add>, %11, %cst_9 [0] : vector<1x2xf32> to vector<2xf32>
    %13 = vector.shape_cast %12 : vector<2xf32> to vector<1x2xf32>
    %14 = arith.addf %10, %13 : vector<1x2xf32>
    %c0_10 = arith.constant 0 : index
    %c0_11 = arith.constant 0 : index
    %15 = vector.load %arg5[%c0_10, %c0_11] : memref<1x2xf32, #tpu.memory_space<vmem>>, vector<1x2xf32>
    tpu.vector_store %arg5[%c0_10, %c0_11], %14 {strides = array<i32>} : memref<1x2xf32, #tpu.memory_space<vmem>>, vector<1x2xf32>,
    return
  }
  func.func @transform_0(%arg0: i32) -> (i32, i32) {
    %c0_i32 = arith.constant 0 : i32
    %c0_i32_0 = arith.constant 0 : i32
    return %c0_i32, %arg0 : i32, i32
  }
  func.func @transform_1(%arg0: i32) -> (i32, i32) {
    %c0_i32 = arith.constant 0 : i32
    %c0_i32_0 = arith.constant 0 : i32
    return %c0_i32, %arg0 : i32, i32
  }
  func.func @transform_2(%arg0: i32) -> (i32, i32) {
    %c0_i32 = arith.constant 0 : i32
    %c0_i32_0 = arith.constant 0 : i32
    return %c0_i32, %arg0 : i32, i32
  }
  func.func @transform_3(%arg0: i32) -> (i32, i32) {
    %c0_i32 = arith.constant 0 : i32
    %c0_i32_0 = arith.constant 0 : i32
    return %c0_i32, %arg0 : i32, i32
  }
  func.func @transform_4(%arg0: i32) -> (i32, i32) {
    %c0_i32 = arith.constant 0 : i32
    %c0_i32_0 = arith.constant 0 : i32
    return %c0_i32, %arg0 : i32, i32
  }
}

</mosaic_0001>

<llo_original>
// kernel: tpu_custom_call.1
$region0: #{tpu_custom_call.1}
  #allocation0 [shape = 'u32[]', space=smem, size = 0x4, offset = 0x4, fixed_abs, tag = 'smem constant byte address 0x4 - core index']
  #allocation1 [shape = 'u32[144,128]{1,0:T(1,128)}', space=vmem, size = 0x12000, scoped, tag = 'internal scratch']
  %s0 = inlined_call_operand.hbm [shape: f32[1,2], index: 0, kind: input, shape index: {}]
  %s1 = inlined_call_operand.vmem [shape: f32[1,2], index: 1, kind: input, shape index: {}]
  %s2 = inlined_call_operand.vmem [shape: f32[1,2], index: 2, kind: input, shape index: {}]
  %s3 = inlined_call_operand.vmem [shape: f32[1,2], index: 3, kind: input, shape index: {}]
  %s4 = inlined_call_operand.hbm [shape: f32[1,2], index: 4, kind: output, shape index: {}]
  %s5 = sld [smem:[#allocation0]]
  $region30: #{tpu_custom_call.1} parent=0
    _
  %s7 = ssub.s32 1, %s5
  %s8 = scalar_select 0, %s7, %s5
  $region1: #{tpu_custom_call.1} parent=0
    #allocation2 [shape = 'u8[512]{0}', space=vmem, size = 0x400, scoped, tag = 'input window, operand 0, single buffered']
    #allocation3 [shape = 's32[1]{0}', space=sflag, size = 0x4, scoped, tag = 'scoped memory for tpu_custom_call.1']
    #allocation4 [shape = 's32[1]{0}', space=sflag, size = 0x4, scoped, tag = 'scoped memory for tpu_custom_call.1']
    #allocation5 [shape = 'u8[512]{0}', space=vmem, size = 0x400, scoped, tag = 'output window, operand 0, single buffered']
    %9 = vsyncpa [#allocation3], 0
    %10 = vsyncpa [#allocation4], 0
    // Predicated region
    $region2: #{tpu_custom_call.1} parent=1 // pred_check
      _
    $region3: #{tpu_custom_call.1} parent=1 // pred_check_branch
      %12 = sbr.rel (0) target = $region5
    $region4: #{tpu_custom_call.1} parent=1 // pred_region
      %s14 = ssub.s32 16, 16
      %15 = vsyncadd [#allocation3], %s14
      %s17 = sshll.u32 [#allocation2], 4
      %s18 = int_to_ptr.vmem [resolvable:$true] %s17
      %20 = dma.hbm_to_vmem [thread:$0]  %s0, 16, %s18, [#allocation3]
    $region5: #{tpu_custom_call.1} parent=1 // pred_fallthru
      _
    // Predicated region
    $region6: #{tpu_custom_call.1} parent=1 // pred_check
      _
    $region7: #{tpu_custom_call.1} parent=1 // pred_check_branch
      %22 = sbr.rel (0) target = $region9
    $region8: #{tpu_custom_call.1} parent=1 // pred_region
      _
    $region9: #{tpu_custom_call.1} parent=1 // pred_fallthru
      _
    // Predicated region
    $region10: #{tpu_custom_call.1} parent=1 // pred_check
      _
    $region11: #{tpu_custom_call.1} parent=1 // pred_check_branch
      %24 = sbr.rel (0) target = $region13
    $region12: #{tpu_custom_call.1} parent=1 // pred_region
      _
    $region13: #{tpu_custom_call.1} parent=1 // pred_fallthru
      _
    // Predicated region
    $region14: #{tpu_custom_call.1} parent=1 // pred_check
      _
    $region15: #{tpu_custom_call.1} parent=1 // pred_check_branch
      %26 = sbr.rel (0) target = $region17
    $region16: #{tpu_custom_call.1} parent=1 // pred_region
      _
    $region17: #{tpu_custom_call.1} parent=1 // pred_fallthru
      _
    // Predicated region
    $region18: #{tpu_custom_call.1} parent=1 // pred_check
      _
    $region19: #{tpu_custom_call.1} parent=1 // pred_check_branch
      %28 = sbr.rel (0) target = $region21
    $region20: #{tpu_custom_call.1} parent=1 // pred_region
      %29 = dma.done [#allocation3], 16
    $region21: #{tpu_custom_call.1} parent=1 // pred_fallthru
      _
    %v30 = vld [vmem:[#allocation2] sm:$0x1]
    %v31 = vadd.f32 %v30, 0.0
    %v32 = vld [vmem:[%s1] sm:$0x1]
    %v33 = vadd.f32 %v32, 0.0
    %v34 = vadd.f32 %v31, %v33
    %v35 = vld [vmem:[%s2] sm:$0x1]
    %v36 = vadd.f32 %v35, 0.0
    %v37 = vadd.f32 %v34, %v36
    %v38 = vld [vmem:[%s3] sm:$0x1]
    %v39 = vadd.f32 %v38, 0.0
    %v40 = vadd.f32 %v37, %v39
    %vm41 = vcmask 8192
    %42 = vst.msk [vmem:[#allocation5] sm:$0x1] %vm41, %v40
    // Predicated region
    $region22: #{tpu_custom_call.1} parent=1 // pred_check
      _
    $region23: #{tpu_custom_call.1} parent=1 // pred_check_branch
      %44 = sbr.rel (0) target = $region25
    $region24: #{tpu_custom_call.1} parent=1 // pred_region
      %s46 = ssub.s32 16, 16
      %47 = vsyncadd [#allocation4], %s46
      %s49 = sshll.u32 [#allocation5], 4
      %s50 = int_to_ptr.vmem [resolvable:$true] %s49
      %52 = dma.vmem_to_hbm [thread:$0]  %s50, 16, %s4, [#allocation4]
    $region25: #{tpu_custom_call.1} parent=1 // pred_fallthru
      _
    // Predicated region
    $region26: #{tpu_custom_call.1} parent=1 // pred_check
      _
    $region27: #{tpu_custom_call.1} parent=1 // pred_check_branch
      %54 = sbr.rel (0) target = $region29
    $region28: #{tpu_custom_call.1} parent=1 // pred_region
      %55 = dma.done [#allocation4], 16
    $region29: #{tpu_custom_call.1} parent=1 // pred_fallthru
      _
    %56 = vsyncpa [#allocation3], 1
    %57 = vsyncpa [#allocation4], 1

</llo_original>
